<compile_context>
chip_gen: v7x
topology: tpu7x:2x2x1
jax: 0.10.0
libtpu: 0.0.40
codegen_flags: <defaults>
</compile_context>

<pallas_src>
from functools import partial

import jax
import jax.numpy as jnp
from jax.experimental import pallas as pl
from jax.experimental.pallas import tpu as pltpu


# ---------------------------------------------------------------------------
# Kernel bodies
# ---------------------------------------------------------------------------


def _norm_lerp_epilogue(xf, h, s):
    """l2norm(h); lerp(residual, ., s); l2norm(.)  -- all in f32."""
    h = h * jax.lax.rsqrt(jnp.maximum(jnp.sum(h * h, axis=-1, keepdims=True), 1e-24))
    y = xf + s * (h - xf)
    y = y * jax.lax.rsqrt(jnp.maximum(jnp.sum(y * y, axis=-1, keepdims=True), 1e-24))
    return y


def _resident_kernel(x_ref, w_ref, bs_ref, o_ref):
    # x_ref: (tm, D) residual rows (original dtype)   w_ref: (D, D) bf16, h = x @ w
    # bs_ref: (2, D) f32 [bias; branch_scale]         o_ref: (tm, D) output rows
    w = w_ref[...]
    bs = bs_ref[...]
    b = bs[0:1, :]
    s = bs[1:2, :]
    half = x_ref.shape[0] // 2
    # Two independent row sub-tiles: MXU pushes of sub-tile 1 overlap the serial
    # VPU/XLU/EUP norm+lerp epilogue of sub-tile 0, and f32 intermediates are halved.
    for r in range(2):
        lo = r * half
        x = x_ref[lo:lo + half, :]
        xf = x.astype(jnp.float32)
        h = jnp.dot(x.astype(jnp.bfloat16), w,
                    preferred_element_type=jnp.float32) + b
        y = _norm_lerp_epilogue(xf, h, s)
        o_ref[lo:lo + half, :] = y.astype(o_ref.dtype)


def _ksplit_kernel(xk_ref, w_ref, x_ref, bs_ref, o_ref, acc_ref):
    # Streamed-weight variant for large D (weight does not fit resident in VMEM).
    # xk_ref: (tm, tk) matmul chunk of x     w_ref: (tk, D) weight stripe (bf16)
    # x_ref:  (tm, D) full residual rows     bs_ref: (2, D) [bias; branch_scale]
    # acc_ref: (tm, D) f32 accumulator scratch
    k = pl.program_id(1)

    @pl.when(k == 0)
    def _():
        acc_ref[...] = jnp.zeros_like(acc_ref)

    acc_ref[...] += jnp.dot(xk_ref[...].astype(jnp.bfloat16), w_ref[...],
                            preferred_element_type=jnp.float32)

    @pl.when(k == pl.num_programs(1) - 1)
    def _():
        bs = bs_ref[...]
        xf = x_ref[...].astype(jnp.float32)
        h = acc_ref[...] + bs[0:1, :]
        y = _norm_lerp_epilogue(xf, h, bs[1:2, :])
        o_ref[...] = y.astype(o_ref.dtype)


# ---------------------------------------------------------------------------
# Wrapper
# ---------------------------------------------------------------------------

_VMEM_CAP = None


def _vmem_capacity_bytes():
    """Per-core VMEM capacity; conservative 64 MiB (v7x) fallback."""
    global _VMEM_CAP
    if _VMEM_CAP is None:
        cap = 64 << 20
        try:  # trace-time hardware query; not a hot-path probe
            cap = int(getattr(pltpu.get_tpu_info(), "vmem_capacity_bytes", cap))
        except Exception:
            pass
        _VMEM_CAP = cap
    return _VMEM_CAP


def _round_up(n, m):
    return ((n + m - 1) // m) * m


@partial(jax.jit, static_argnames=("force_ksplit_tk",))
def residual_spherical_lerp(x, weight, bias, scale_vec, *, force_ksplit_tk=None):
    """x: (B, S, D).  weight: (D, D) laid out so h = x @ weight (i.e. Linear.weight.T).
    bias, scale_vec: (D,).  Output dtype == x.dtype."""
    B, S, D = x.shape
    M = B * S
    out_dtype = x.dtype
    nb = x.dtype.itemsize  # bytes/elem for the streamed x / out tiles

    x2 = x.reshape(M, D)  # metadata-only reshape: no HBM pass over x
    # Small one-time casts (D*D and 2*D); pre-materialize these once in a real model.
    w_bf16 = weight.astype(jnp.bfloat16)
    bs = jnp.stack([bias.astype(jnp.float32), scale_vec.astype(jnp.float32)], axis=0)

    cap = _vmem_capacity_bytes()
    budget = cap - (8 << 20)
    # Bigger row tiles on 128-MiB-VMEM chips (v5e/v6e); 256 on v7x (64 MiB).
    tm = 512 if cap >= (96 << 20) else 256
    tm = max(16, min(tm, _round_up(M, 16)))  # multiple of 16 (two 8-row sub-tiles)

    def est_resident(tm_):
        return (2 * tm_ * D * 2 * nb          # double-buffered x + out tiles
                + 2 * D * D * 2               # bf16 weight (pipeline buffers)
                + 2 * 2 * D * 4               # bias / branch-scale
                + 4 * (tm_ // 2) * D * 4      # f32 epilogue intermediates per sub-tile
                + (4 << 20))                  # headroom

    def est_ksplit(tm_, tk_):
        return (2 * tm_ * tk_ * nb            # x matmul chunks
                + 2 * tk_ * D * 2             # weight stripes
                + 2 * tm_ * D * 2 * nb        # full-x + out tiles
                + tm_ * D * 4                 # f32 accumulator scratch
                + 3 * tm_ * D * 4             # epilogue intermediates
                + 2 * 2 * D * 4
                + (4 << 20))

    tk = None
    if force_ksplit_tk is not None:
        tk = int(force_ksplit_tk)
        if D % tk != 0:
            raise ValueError(f"force_ksplit_tk={tk} must divide D={D}")
    elif est_resident(tm) > budget:
        # Resident bf16 weight does not fit (e.g. v7x, D >= ~4k): stream weight
        # stripes over a trailing "arbitrary" K axis with an f32 accumulator.
        tk = next((c for c in (1024, 512, 256, 128) if D % c == 0), None)

    cost = pl.CostEstimate(
        flops=2 * M * D * D + 10 * M * D,
        transcendentals=2 * M,
        bytes_accessed=M * D * 2 * nb + D * D * 2 + 2 * D * 4,
    )

    if tk is None:
        # -------- resident-weight path --------
        while est_resident(tm) > budget and tm > 16:
            tm = max(16, _round_up(tm // 2, 16))
        vmem_limit = int(min(max(est_resident(tm), 32 << 20), budget))
        call = pl.pallas_call(
            _resident_kernel,
            out_shape=jax.ShapeDtypeStruct((M, D), out_dtype),
            grid_spec=pltpu.PrefetchScalarGridSpec(
                num_scalar_prefetch=0,
                grid=(pl.cdiv(M, tm),),
                in_specs=[
                    pl.BlockSpec((tm, D), lambda i: (i, 0)),   # x rows (streamed)
                    pl.BlockSpec((D, D), lambda i: (0, 0)),    # weight (fetched once)
                    pl.BlockSpec((2, D), lambda i: (0, 0)),    # bias + branch-scale
                ],
                out_specs=pl.BlockSpec((tm, D), lambda i: (i, 0)),
            ),
            compiler_params=pltpu.CompilerParams(
                dimension_semantics=("parallel",),
                vmem_limit_bytes=vmem_limit,
            ),
            cost_estimate=cost,
        )
        out = call(x2, w_bf16, bs)
    else:
        # -------- K-split path (streamed weight) --------
        while est_ksplit(tm, tk) > budget and tm > 16:
            tm = max(16, _round_up(tm // 2, 16))
        vmem_limit = int(min(max(est_ksplit(tm, tk), 32 << 20), budget))
        call = pl.pallas_call(
            _ksplit_kernel,
            out_shape=jax.ShapeDtypeStruct((M, D), out_dtype),
            grid_spec=pltpu.PrefetchScalarGridSpec(
                num_scalar_prefetch=0,
                grid=(pl.cdiv(M, tm), D // tk),
                in_specs=[
                    pl.BlockSpec((tm, tk), lambda i, k: (i, k)),  # x matmul chunks
                    pl.BlockSpec((tk, D), lambda i, k: (k, 0)),   # weight stripes
                    pl.BlockSpec((tm, D), lambda i, k: (i, 0)),   # full residual rows
                    pl.BlockSpec((2, D), lambda i, k: (0, 0)),    # bias + branch-scale
                ],
                out_specs=pl.BlockSpec((tm, D), lambda i, k: (i, 0)),
                scratch_shapes=[pltpu.VMEM((tm, D), jnp.float32)],
            ),
            compiler_params=pltpu.CompilerParams(
                dimension_semantics=("parallel", "arbitrary"),
                vmem_limit_bytes=vmem_limit,
            ),
            cost_estimate=cost,
        )
        out = call(x2, w_bf16, x2, bs)

    return out.reshape(B, S, D)


def reference(x, weight, bias, scale_vec):
    h = jnp.einsum("bsd,de->bse", x, weight) + bias
    h = h / jnp.maximum(jnp.linalg.norm(h, axis=-1, keepdims=True), 1e-12)
    y = x + scale_vec * (h - x)
    y = y / jnp.maximum(jnp.linalg.norm(y, axis=-1, keepdims=True), 1e-12)
    return y


# ---------------------------------------------------------------------------
# Demo / self-test
# ---------------------------------------------------------------------------

if __name__ == "__main__":
    root = jax.random.PRNGKey(0)

    def run_case(key, B, S, D, force_ksplit_tk=None):
        init = 0.05                      # Scale(dim, init, scale) with scale = D**-0.5
        scale_base = D ** (-0.5)
        k_x, k_w, k_b, k_s = jax.random.split(key, 4)
        x = jax.random.normal(k_x, (B, S, D), dtype=jnp.float32)
        # fn = Linear(D, D). PyTorch computes x @ W.T; we pass the transposed matrix.
        weight = jax.random.normal(k_w, (D, D), dtype=jnp.float32) * (D ** -0.5)
        bias = jax.random.normal(k_b, (D,), dtype=jnp.float32) * 0.01
        scale_param = scale_base * (
            1.0 + 0.01 * jax.random.normal(k_s, (D,), dtype=jnp.float32))
        branch_scale = scale_param * (init / scale_base)   # == Scale.forward()

        y = jax.block_until_ready(
            residual_spherical_lerp(x, weight, bias, branch_scale,
                                    force_ksplit_tk=force_ksplit_tk))
        y_ref = reference(x, weight, bias, branch_scale)
        assert y.shape == x.shape and y.dtype == x.dtype
        assert bool(jnp.isfinite(y).all())
        # bf16 MXU operands vs. f32 reference: both paths re-normalize, so the
        # relative error stays well under this tolerance.
        assert jnp.allclose(y, y_ref, atol=5e-3, rtol=5e-3), "mismatch vs reference"

    k1, k2 = jax.random.split(root)
    # 1) Resident-weight kernel, small hidden dim, two-row-sub-tile body.
    run_case(k1, B=2, S=8, D=32)
    # 2) K-split kernel (streamed weight stripes + f32 accumulator) with a partial
    #    last row block (M=24, tm=32) and a lane-dense feature dim.
    run_case(k2, B=3, S=8, D=256, force_ksplit_tk=128)

    print("KERNEL_OK")
</pallas_src>

<mosaic_0001>
module attributes {stable_mosaic.version = 11 : i64} {
  func.func @_resident_kernel(%arg0: i32, %arg1: memref<16x32xf32, #tpu.memory_space<vmem>>, %arg2: memref<32x32xbf16, #tpu.memory_space<vmem>>, %arg3: memref<2x32xf32, #tpu.memory_space<vmem>>, %arg4: memref<16x32xf32, #tpu.memory_space<vmem>>) attributes {dimension_semantics = [#tpu.dimension_semantics<parallel>], iteration_bounds = array<i64: 1>, scalar_prefetch = 0 : i64, scratch_operands = 0 : i64, tpu.core_type = #tpu.core_type<tc>, window_params = [{transform_indices = @transform_0, window_bounds = array<i64: 16, 32>}, {pipeline_mode = #tpu.pipeline_mode<synchronous>, transform_indices = @transform_1, window_bounds = array<i64: 32, 32>}, {pipeline_mode = #tpu.pipeline_mode<synchronous>, transform_indices = @transform_2, window_bounds = array<i64: 2, 32>}, {transform_indices = @transform_3, window_bounds = array<i64: 16, 32>}]} {
    %c0 = arith.constant 0 : index
    %c0_0 = arith.constant 0 : index
    %0 = vector.load %arg2[%c0, %c0_0] : memref<32x32xbf16, #tpu.memory_space<vmem>>, vector<32x32xbf16>
    %c0_1 = arith.constant 0 : index
    %c0_2 = arith.constant 0 : index
    %1 = vector.load %arg3[%c0_1, %c0_2] : memref<2x32xf32, #tpu.memory_space<vmem>>, vector<2x32xf32>
    %2 = vector.extract_strided_slice %1 {offsets = [0, 0], sizes = [1, 32], strides = [1, 1]} : vector<2x32xf32> to vector<1x32xf32>
    %3 = vector.extract_strided_slice %1 {offsets = [1, 0], sizes = [1, 32], strides = [1, 1]} : vector<2x32xf32> to vector<1x32xf32>
    %c0_3 = arith.constant 0 : index
    %c0_4 = arith.constant 0 : index
    %4 = vector.load %arg1[%c0_3, %c0_4] : memref<16x32xf32, #tpu.memory_space<vmem>>, vector<8x32xf32>
    %5 = arith.truncf %4 : vector<8x32xf32> to vector<8x32xbf16>
    %cst = arith.constant dense<0.000000e+00> : vector<8x32xf32>
    %6 = tpu.matmul %5, %0, %cst {dimension_numbers = #tpu.dot_dimension_numbers<[1], [0], [0], [1], [0, 0, 1, 1], [], []>} : vector<8x32xbf16>, vector<32x32xbf16>, vector<8x32xf32> -> vector<8x32xf32>
    %7 = vector.broadcast %2 : vector<1x32xf32> to vector<8x32xf32>
    %8 = arith.addf %6, %7 : vector<8x32xf32>
    %9 = arith.mulf %8, %8 : vector<8x32xf32>
    %cst_5 = arith.constant dense<0.000000e+00> : vector<8xf32>
    %10 = vector.multi_reduction <add>, %9, %cst_5 [1] : vector<8x32xf32> to vector<8xf32>
    %11 = vector.shape_cast %10 : vector<8xf32> to vector<8x1xf32>
    %cst_6 = arith.constant 1.000000e-24 : f32
    %12 = vector.broadcast %cst_6 : f32 to vector<8x1xf32>
    %13 = arith.maximumf %11, %12 : vector<8x1xf32>
    %14 = math.rsqrt %13 : vector<8x1xf32>
    %15 = vector.broadcast %14 : vector<8x1xf32> to vector<8x32xf32>
    %16 = arith.mulf %8, %15 : vector<8x32xf32>
    %17 = arith.subf %16, %4 : vector<8x32xf32>
    %18 = vector.broadcast %3 : vector<1x32xf32> to vector<8x32xf32>
    %19 = arith.mulf %18, %17 : vector<8x32xf32>
    %20 = arith.addf %4, %19 : vector<8x32xf32>
    %21 = arith.mulf %20, %20 : vector<8x32xf32>
    %cst_7 = arith.constant dense<0.000000e+00> : vector<8xf32>
    %22 = vector.multi_reduction <add>, %21, %cst_7 [1] : vector<8x32xf32> to vector<8xf32>
    %23 = vector.shape_cast %22 : vector<8xf32> to vector<8x1xf32>
    %cst_8 = arith.constant 1.000000e-24 : f32
    %24 = vector.broadcast %cst_8 : f32 to vector<8x1xf32>
    %25 = arith.maximumf %23, %24 : vector<8x1xf32>
    %26 = math.rsqrt %25 : vector<8x1xf32>
    %27 = vector.broadcast %26 : vector<8x1xf32> to vector<8x32xf32>
    %28 = arith.mulf %20, %27 : vector<8x32xf32>
    %c0_9 = arith.constant 0 : index
    %c0_10 = arith.constant 0 : index
    %29 = vector.load %arg4[%c0_9, %c0_10] : memref<16x32xf32, #tpu.memory_space<vmem>>, vector<8x32xf32>
    tpu.vector_store %arg4[%c0_9, %c0_10], %28 {strides = array<i32>} : memref<16x32xf32, #tpu.memory_space<vmem>>, vector<8x32xf32>,
    %c8 = arith.constant 8 : index
    %c0_11 = arith.constant 0 : index
    %30 = vector.load %arg1[%c8, %c0_11] : memref<16x32xf32, #tpu.memory_space<vmem>>, vector<8x32xf32>
    %31 = arith.truncf %30 : vector<8x32xf32> to vector<8x32xbf16>
    %cst_12 = arith.constant dense<0.000000e+00> : vector<8x32xf32>
    %32 = tpu.matmul %31, %0, %cst_12 {dimension_numbers = #tpu.dot_dimension_numbers<[1], [0], [0], [1], [0, 0, 1, 1], [], []>} : vector<8x32xbf16>, vector<32x32xbf16>, vector<8x32xf32> -> vector<8x32xf32>
    %33 = vector.broadcast %2 : vector<1x32xf32> to vector<8x32xf32>
    %34 = arith.addf %32, %33 : vector<8x32xf32>
    %35 = arith.mulf %34, %34 : vector<8x32xf32>
    %cst_13 = arith.constant dense<0.000000e+00> : vector<8xf32>
    %36 = vector.multi_reduction <add>, %35, %cst_13 [1] : vector<8x32xf32> to vector<8xf32>
    %37 = vector.shape_cast %36 : vector<8xf32> to vector<8x1xf32>
    %cst_14 = arith.constant 1.000000e-24 : f32
    %38 = vector.broadcast %cst_14 : f32 to vector<8x1xf32>
    %39 = arith.maximumf %37, %38 : vector<8x1xf32>
    %40 = math.rsqrt %39 : vector<8x1xf32>
    %41 = vector.broadcast %40 : vector<8x1xf32> to vector<8x32xf32>
    %42 = arith.mulf %34, %41 : vector<8x32xf32>
    %43 = arith.subf %42, %30 : vector<8x32xf32>
    %44 = vector.broadcast %3 : vector<1x32xf32> to vector<8x32xf32>
    %45 = arith.mulf %44, %43 : vector<8x32xf32>
    %46 = arith.addf %30, %45 : vector<8x32xf32>
    %47 = arith.mulf %46, %46 : vector<8x32xf32>
    %cst_15 = arith.constant dense<0.000000e+00> : vector<8xf32>
    %48 = vector.multi_reduction <add>, %47, %cst_15 [1] : vector<8x32xf32> to vector<8xf32>
    %49 = vector.shape_cast %48 : vector<8xf32> to vector<8x1xf32>
    %cst_16 = arith.constant 1.000000e-24 : f32
    %50 = vector.broadcast %cst_16 : f32 to vector<8x1xf32>
    %51 = arith.maximumf %49, %50 : vector<8x1xf32>
    %52 = math.rsqrt %51 : vector<8x1xf32>
    %53 = vector.broadcast %52 : vector<8x1xf32> to vector<8x32xf32>
    %54 = arith.mulf %46, %53 : vector<8x32xf32>
    %c8_17 = arith.constant 8 : index
    %c0_18 = arith.constant 0 : index
    %55 = vector.load %arg4[%c8_17, %c0_18] : memref<16x32xf32, #tpu.memory_space<vmem>>, vector<8x32xf32>
    tpu.vector_store %arg4[%c8_17, %c0_18], %54 {strides = array<i32>} : memref<16x32xf32, #tpu.memory_space<vmem>>, vector<8x32xf32>,
    return
  }
  func.func @transform_0(%arg0: i32) -> (i32, i32) {
    %c0_i32 = arith.constant 0 : i32
    %c0_i32_0 = arith.constant 0 : i32
    return %arg0, %c0_i32 : i32, i32
  }
  func.func @transform_1(%arg0: i32) -> (i32, i32) {
    %c0_i32 = arith.constant 0 : i32
    %c0_i32_0 = arith.constant 0 : i32
    %c0_i32_1 = arith.constant 0 : i32
    return %c0_i32, %c0_i32_0 : i32, i32
  }
  func.func @transform_2(%arg0: i32) -> (i32, i32) {
    %c0_i32 = arith.constant 0 : i32
    %c0_i32_0 = arith.constant 0 : i32
    %c0_i32_1 = arith.constant 0 : i32
    return %c0_i32, %c0_i32_0 : i32, i32
  }
  func.func @transform_3(%arg0: i32) -> (i32, i32) {
    %c0_i32 = arith.constant 0 : i32
    %c0_i32_0 = arith.constant 0 : i32
    return %arg0, %c0_i32 : i32, i32
  }
}

</mosaic_0001>

<llo_original>
// kernel: residual_spherical_lerp.1
$region0: #{residual_spherical_lerp.1}
  #allocation0 [shape = 'u32[]', space=smem, size = 0x4, offset = 0x4, fixed_abs, tag = 'smem constant byte address 0x4 - core index']
  #allocation1 [shape = 'u32[144,128]{1,0:T(1,128)}', space=vmem, size = 0x12000, scoped, tag = 'internal scratch']
  %s0 = inlined_call_operand.vmem [shape: f32[16,32], index: 0, kind: input, shape index: {}]
  %s1 = inlined_call_operand.vmem [shape: bf16[32,32], index: 1, kind: input, shape index: {}]
  %s2 = inlined_call_operand.vmem [shape: f32[2,32], index: 2, kind: input, shape index: {}]
  %s3 = inlined_call_operand.hbm [shape: f32[16,32], index: 3, kind: output, shape index: {}]
  %s4 = sld [smem:[#allocation0]]
  $region22: #{residual_spherical_lerp.1} parent=0
    _
  %s6 = ssub.s32 1, %s4
  %s7 = scalar_select 0, %s6, %s4
  $region1: #{residual_spherical_lerp.1} parent=0
    #allocation2 [shape = 'u8[8192]{0}', space=vmem, size = 0x2000, scoped, tag = 'output window, operand 0, single buffered']
    #allocation3 [shape = 's32[1]{0}', space=sflag, size = 0x4, scoped, tag = 'scoped memory for residual_spherical_lerp.1']
    %8 = vsyncpa [#allocation3], 0
    // Predicated region
    $region2: #{residual_spherical_lerp.1} parent=1 // pred_check
      _
    $region3: #{residual_spherical_lerp.1} parent=1 // pred_check_branch
      %10 = sbr.rel (0) target = $region5
    $region4: #{residual_spherical_lerp.1} parent=1 // pred_region
      _
    $region5: #{residual_spherical_lerp.1} parent=1 // pred_fallthru
      _
    // Predicated region
    $region6: #{residual_spherical_lerp.1} parent=1 // pred_check
      _
    $region7: #{residual_spherical_lerp.1} parent=1 // pred_check_branch
      %12 = sbr.rel (0) target = $region9
    $region8: #{residual_spherical_lerp.1} parent=1 // pred_region
      _
    $region9: #{residual_spherical_lerp.1} parent=1 // pred_fallthru
      _
    // Predicated region
    $region10: #{residual_spherical_lerp.1} parent=1 // pred_check
      _
    $region11: #{residual_spherical_lerp.1} parent=1 // pred_check_branch
      %14 = sbr.rel (0) target = $region13
    $region12: #{residual_spherical_lerp.1} parent=1 // pred_region
      _
    $region13: #{residual_spherical_lerp.1} parent=1 // pred_fallthru
      _
    %v16 = vld [vmem:[%s1] sm:$0xf]
    %v17 = vld [vmem:[%s1 + $0x4] sm:$0xf]
    %v18 = vld [vmem:[%s1 + $0x8] sm:$0xf]
    %v19 = vld [vmem:[%s1 + $0xc] sm:$0xf]
    %v20 = vld [vmem:[%s2] sm:$0x3]
    %v21 = vld [vmem:[%s0] sm:$0xff]
    %v22 = vpack.c.bf16 %v21, %v21
    %v23 = vlaneseq
    %v24 = vshrl.u32 %v23, 7
    %v25 = vsub.s32 0, %v24
    %v26 = vrot.slane %v20, %v25
    %v31 = vunpack.c.l.b16 %v16
    %v32 = vunpack.c.l.b16 %v17
    %v33 = vunpack.c.l.b16 %v18
    %v34 = vunpack.c.l.b16 %v19
    %v35 = vpack.c.b16 %v32, %v31
    %v36 = vpack.c.b16 %v34, %v33
    %vm39 = vcmask 261120
    %v41 = vsel %vm39, %v22, 0
    %43 = vmatprep.subr.bf16.mxu0 0
    %44 = vmatpush1.bf16.msra.mxu0 %v35
    %45 = vmatprep.subr.bf16.mxu0 0
    %46 = vmatpush1.bf16.msra.mxu0 %v36
    %47 = vmatprep.subr.bf16.mxu0 0
    %48 = vmatpush1.bf16.msra.mxu0 0
    %49 = vmatprep.subr.bf16.mxu0 0
    %50 = vmatpush1.bf16.msra.mxu0 0
    %51 = vmatprep.subr.bf16.mxu0 0
    %52 = vmatpush1.bf16.msra.mxu0 0
    %53 = vmatprep.subr.bf16.mxu0 0
    %54 = vmatpush1.bf16.msra.mxu0 0
    %55 = vmatprep.subr.bf16.mxu0 0
    %56 = vmatpush1.bf16.msra.mxu0 0
    %57 = vmatprep.subr.bf16.mxu0 0
    %58 = vmatpush1.bf16.msra.mxu0 0
    %59 = vmatprep.subr.bf16.mxu0 0
    %60 = vmatpush1.bf16.msra.mxu0 0
    %61 = vmatprep.subr.bf16.mxu0 0
    %62 = vmatpush1.bf16.msra.mxu0 0
    %63 = vmatprep.subr.bf16.mxu0 0
    %64 = vmatpush1.bf16.msra.mxu0 0
    %65 = vmatprep.subr.bf16.mxu0 0
    %66 = vmatpush1.bf16.msra.mxu0 0
    %67 = vmatprep.subr.bf16.mxu0 0
    %68 = vmatpush1.bf16.msra.mxu0 0
    %69 = vmatprep.subr.bf16.mxu0 0
    %70 = vmatpush1.bf16.msra.mxu0 0
    %71 = vmatprep.subr.bf16.mxu0 0
    %72 = vmatpush1.bf16.msra.mxu0 0
    %73 = vmatprep.subr.bf16.mxu0 0
    %74 = vmatpush1.bf16.msra.mxu0 0
    %75 = vmatprep.mubr.bf16.mxu0 0
    %76 = vmatmul.mubr.bf16.gmra.mrb[0].mxu0 %v41
    %v77 = vpop.f32.mrb[0].mxu0
    %v78 = vadd.f32 %v26, %v77
    %v79 = vpop.f32.mrb[0].mxu0
    %v80 = vpop.f32.mrb[0].mxu0
    %v81 = vpop.f32.mrb[0].mxu0
    %82 = vdwg.mxu0
    %v83 = vmul.f32 %v78, %v78
    %v84 = vsel %vm39, %v83, 0.0
    %85 = vadd.xlane.f32.xlu0 %v84
    %v86 = vpop.xlane.xlu0 %85
    %v87 = vmax.f32 %v86, 1e-24
    %v88 = vrsqrt.pop %v87
    %v89 = vmul.f32 %v78, %v88
    %v90 = vsub.f32 %v89, %v21
    %v91 = vlaneseq
    %v92 = vshrl.u32 %v91, 7
    %v93 = vsub.s32 1, %v92
    %v94 = vrot.slane %v20, %v93
    %v95 = vmul.f32 %v94, %v90
    %v96 = vadd.f32 %v21, %v95
    %v97 = vmul.f32 %v96, %v96
    %v98 = vsel %vm39, %v97, 0.0
    %99 = vadd.xlane.f32.xlu0 %v98
    %v100 = vpop.xlane.xlu0 %99
    %v101 = vmax.f32 %v100, 1e-24
    %v102 = vrsqrt.pop %v101
    %v103 = vmul.f32 %v96, %v102
    %104 = vst.msk [vmem:[#allocation2] sm:$0xff] %vm39, %v103
    %v105 = vld [vmem:[%s0 + $0x8] sm:$0xff]
    %v106 = vpack.c.bf16 %v105, %v105
    %v108 = vsel %vm39, %v106, 0
    %110 = vmatprep.subr.bf16.mxu0 0
    %111 = vmatpush1.bf16.msra.mxu0 %v35
    %112 = vmatprep.subr.bf16.mxu0 0
    %113 = vmatpush1.bf16.msra.mxu0 %v36
    %114 = vmatprep.subr.bf16.mxu0 0
    %115 = vmatpush1.bf16.msra.mxu0 0
    %116 = vmatprep.subr.bf16.mxu0 0
    %117 = vmatpush1.bf16.msra.mxu0 0
    %118 = vmatprep.subr.bf16.mxu0 0
    %119 = vmatpush1.bf16.msra.mxu0 0
    %120 = vmatprep.subr.bf16.mxu0 0
    %121 = vmatpush1.bf16.msra.mxu0 0
    %122 = vmatprep.subr.bf16.mxu0 0
    %123 = vmatpush1.bf16.msra.mxu0 0
    %124 = vmatprep.subr.bf16.mxu0 0
    %125 = vmatpush1.bf16.msra.mxu0 0
    %126 = vmatprep.subr.bf16.mxu0 0
    %127 = vmatpush1.bf16.msra.mxu0 0
    %128 = vmatprep.subr.bf16.mxu0 0
    %129 = vmatpush1.bf16.msra.mxu0 0
    %130 = vmatprep.subr.bf16.mxu0 0
    %131 = vmatpush1.bf16.msra.mxu0 0
    %132 = vmatprep.subr.bf16.mxu0 0
    %133 = vmatpush1.bf16.msra.mxu0 0
    %134 = vmatprep.subr.bf16.mxu0 0
    %135 = vmatpush1.bf16.msra.mxu0 0
    %136 = vmatprep.subr.bf16.mxu0 0
    %137 = vmatpush1.bf16.msra.mxu0 0
    %138 = vmatprep.subr.bf16.mxu0 0
    %139 = vmatpush1.bf16.msra.mxu0 0
    %140 = vmatprep.subr.bf16.mxu0 0
    %141 = vmatpush1.bf16.msra.mxu0 0
    %142 = vmatprep.mubr.bf16.mxu0 0
    %143 = vmatmul.mubr.bf16.gmra.mrb[0].mxu0 %v108
    %v144 = vpop.f32.mrb[0].mxu0
    %v145 = vadd.f32 %v26, %v144
    %v146 = vpop.f32.mrb[0].mxu0
    %v147 = vpop.f32.mrb[0].mxu0
    %v148 = vpop.f32.mrb[0].mxu0
    %149 = vdwg.mxu0
    %v150 = vmul.f32 %v145, %v145
    %v151 = vsel %vm39, %v150, 0.0
    %152 = vadd.xlane.f32.xlu0 %v151
    %v153 = vpop.xlane.xlu0 %152
    %v154 = vmax.f32 %v153, 1e-24
    %v155 = vrsqrt.pop %v154
    %v156 = vmul.f32 %v145, %v155
    %v157 = vsub.f32 %v156, %v105
    %v158 = vmul.f32 %v94, %v157
    %v159 = vadd.f32 %v105, %v158
    %v160 = vmul.f32 %v159, %v159
    %v161 = vsel %vm39, %v160, 0.0
    %162 = vadd.xlane.f32.xlu0 %v161
    %v163 = vpop.xlane.xlu0 %162
    %v164 = vmax.f32 %v163, 1e-24
    %v165 = vrsqrt.pop %v164
    %v166 = vmul.f32 %v159, %v165
    %167 = vst.msk [vmem:[#allocation2 + $0x8] sm:$0xff] %vm39, %v166
    // Predicated region
    $region14: #{residual_spherical_lerp.1} parent=1 // pred_check
      _
    $region15: #{residual_spherical_lerp.1} parent=1 // pred_check_branch
      %169 = sbr.rel (0) target = $region17
    $region16: #{residual_spherical_lerp.1} parent=1 // pred_region
      %s171 = ssub.s32 256, 256
      %172 = vsyncadd [#allocation3], %s171
      %s173 = sshll.u32 [#allocation2], 4
      %s174 = int_to_ptr.vmem [resolvable:$true] %s173
      %179 = dma.vmem_to_hbm [thread:$0]  %s174, 256, %s3, [#allocation3], 128, 128, 8
    $region17: #{residual_spherical_lerp.1} parent=1 // pred_fallthru
      _
    // Predicated region
    $region18: #{residual_spherical_lerp.1} parent=1 // pred_check
      _
    $region19: #{residual_spherical_lerp.1} parent=1 // pred_check_branch
      %181 = sbr.rel (0) target = $region21
    $region20: #{residual_spherical_lerp.1} parent=1 // pred_region
      %182 = dma.done [#allocation3], 256
    $region21: #{residual_spherical_lerp.1} parent=1 // pred_fallthru
      _
    %183 = vsyncpa [#allocation3], 1

</llo_original>
